<compile_context>
chip_gen: v7x
topology: tpu7x:2x2x1
jax: 0.10.0
libtpu: 0.0.40
codegen_flags: <defaults>
</compile_context>

<pallas_src>
import functools
import math

import jax
import jax.numpy as jnp
from jax.experimental import pallas as pl
from jax.experimental.pallas import tpu as pltpu

_LANES = 128


def _cdiv(a, b):
    return -(-a // b)


def _round_up(x, m):
    return _cdiv(x, m) * m


def _min_sublanes(dtype):
    # Minimum sublane multiple for a (sublane, 128) tile of this dtype:
    # f32 -> 8, bf16 -> 16, int8 -> 32.
    return 8 * (4 // jnp.dtype(dtype).itemsize)


def _pick_feature_tiling(BN, sublane_block, sub_mult):
    """Return (R_pad, rb): padded 128-lane row count and sublane block size."""
    R = _cdiv(BN, _LANES)

    # 1) rb (multiple of sub_mult) that exactly divides R -> zero row padding.
    #    First pass tries to guarantee >= 2 feature blocks (v7x megacore).
    for want_two in (True, False):
        hi = min(sublane_block, R // 2 if want_two else R)
        d = (hi // sub_mult) * sub_mult
        while d >= sub_mult:
            if R % d == 0:
                return R, d
            d -= sub_mult

    # 2) whole feature axis as a single full-dim block (full-dim blocks have
    #    no sublane-alignment requirement) -> zero row padding.
    if R <= sublane_block:
        return R, R

    # 3) fall back: aligned rb with minimal row padding (ties -> larger rb).
    best_rb, best_pad = None, None
    d = max(sub_mult, (sublane_block // sub_mult) * sub_mult)
    while d >= sub_mult:
        pad = _round_up(R, d) - R
        if best_pad is None or pad < best_pad:
            best_rb, best_pad = d, pad
        d -= sub_mult
    return _round_up(R, best_rb), best_rb


def _pick_time_tiling(T, time_block):
    """Return (tt, T_pad). Prefer tt dividing T (no padded time steps)."""
    tb = max(1, min(time_block, T))
    tt_div = None
    for tt in range(tb, 0, -1):
        if T % tt == 0:
            tt_div = tt
            break
    if tt_div is not None and (tt_div == T or 4 * tt_div >= tb):
        return tt_div, T
    # Pathologically small divisor (e.g. prime T): pad T instead.
    return tb, _round_up(T, tb)


def _lif_kernel(x_ref, o_ref, mem_ref, syn_ref, *, tau, v_threshold, time_block):
    # mem/syn state persists across the innermost (time) grid axis; re-zero it
    # whenever a new feature block begins its time sweep.
    @pl.when(pl.program_id(1) == 0)
    def _():
        mem_ref[...] = jnp.zeros_like(mem_ref)
        syn_ref[...] = jnp.zeros_like(syn_ref)

    decay = jnp.float32(1.0 - 1.0 / tau)
    vth = jnp.float32(v_threshold)
    zero = jnp.float32(0.0)

    def step(i, carry):
        mem, syn = carry                            # (rb, 128) f32 each
        spiked = (mem - vth) > zero                 # strict '>' like reference
        o_ref[i] = spiked.astype(o_ref.dtype)       # exact 0.0 / 1.0
        # Reset fused into a select: ((1-1/tau)*mem + syn) * (1 - spike).
        new_mem = jnp.where(spiked, zero, decay * mem + syn)
        new_syn = x_ref[i].astype(jnp.float32)      # syn[t+1] = inputs[t]
        return new_mem, new_syn

    mem, syn = jax.lax.fori_loop(
        0, time_block, step, (mem_ref[...], syn_ref[...]),
        unroll=max(1, math.gcd(time_block, 8)))

    # Only the final (rb, 128) state of this time block is carried forward.
    mem_ref[...] = mem
    syn_ref[...] = syn


def lif_forward(inputs, tau=2.0, v_threshold=1.0, detach_reset=True, *,
                time_block=64, sublane_block=64, out_dtype=jnp.bfloat16,
                vmem_budget_bytes=24 * 1024 * 1024):
    """inputs: (T, B, N) -> spikes (T, B, N); values are exactly 0.0 / 1.0."""
    del detach_reset  # forward pass is identical either way
    T, B, N = inputs.shape
    BN = B * N

    # Stream the input in its native dtype (f32 or bf16); compute stays f32.
    if inputs.dtype not in (jnp.dtype(jnp.float32), jnp.dtype(jnp.bfloat16)):
        inputs = inputs.astype(jnp.float32)
    in_dtype = inputs.dtype
    out_dtype = jnp.dtype(out_dtype)

    sub_mult = max(_min_sublanes(in_dtype), _min_sublanes(out_dtype))
    R_pad, rb = _pick_feature_tiling(BN, sublane_block, sub_mult)

    # Keep double-buffered in/out blocks within the VMEM budget (v7x: 64 MiB
    # physical, 32 MiB scoped default) by capping the time block if needed.
    per_step_bytes = 2 * rb * _LANES * (in_dtype.itemsize + out_dtype.itemsize)
    max_tt = max(1, min(time_block, vmem_budget_bytes // per_step_bytes))
    tt, T_pad = _pick_time_tiling(T, max_tt)

    x = inputs.reshape(T, BN)
    pad_t, pad_f = T_pad - T, R_pad * _LANES - BN
    if pad_t or pad_f:
        # Only materialized for ragged shapes; the common case is pad-free.
        x = jnp.pad(x, ((0, pad_t), (0, pad_f)))
    x = x.reshape(T_pad, R_pad, _LANES)

    grid = (R_pad // rb, T_pad // tt)   # (feature, time); time innermost

    kernel = functools.partial(
        _lif_kernel, tau=float(tau), v_threshold=float(v_threshold),
        time_block=tt)

    out = pl.pallas_call(
        kernel,
        out_shape=jax.ShapeDtypeStruct((T_pad, R_pad, _LANES), out_dtype),
        grid_spec=pltpu.PrefetchScalarGridSpec(
            num_scalar_prefetch=0,
            grid=grid,
            in_specs=[pl.BlockSpec((tt, rb, _LANES), lambda f, t: (t, f, 0))],
            out_specs=pl.BlockSpec((tt, rb, _LANES), lambda f, t: (t, f, 0)),
            scratch_shapes=[
                pltpu.VMEM((rb, _LANES), jnp.float32),   # mem state
                pltpu.VMEM((rb, _LANES), jnp.float32),   # syn state
            ],
        ),
        compiler_params=pltpu.CompilerParams(
            # Feature blocks are independent -> parallel (megacore sharding);
            # time is a recurrence -> arbitrary, and must stay innermost.
            dimension_semantics=("parallel", "arbitrary"),
        ),
    )(x)

    out = out.reshape(T_pad, R_pad * _LANES)
    if pad_t or pad_f:
        out = out[:T, :BN]
    return out.reshape(T, B, N)


def lif_reference(inputs, tau=2.0, v_threshold=1.0):
    """Pure-JAX reference matching the PyTorch module's forward."""
    T, B, N = inputs.shape
    decay = 1.0 - 1.0 / tau

    def step(carry, x_t):
        mem, syn = carry
        mthr = mem - v_threshold
        out = (mthr > 0).astype(jnp.float32)
        new_mem = (decay * mem + syn) * (1.0 - out)
        return (new_mem, x_t), out

    init = (jnp.zeros((B, N), jnp.float32), jnp.zeros((B, N), jnp.float32))
    _, spk = jax.lax.scan(step, init, inputs.astype(jnp.float32))
    return spk  # (T, B, N)


if __name__ == "__main__":
    key = jax.random.PRNGKey(0)
    k1, k2, k3 = jax.random.split(key, 3)
    tau, v_threshold = 2.0, 1.0

    # Case 1: small shape matching the module layout (T, B, N); single block,
    # pad-free path (B*N == 128).
    T, B, N = 8, 4, 32
    x = 2.0 * jax.random.uniform(k1, (T, B, N), dtype=jnp.float32)
    out = jax.block_until_ready(lif_forward(x, tau=tau, v_threshold=v_threshold))
    ref = lif_reference(x, tau=tau, v_threshold=v_threshold)
    assert out.shape == (T, B, N)
    assert jnp.array_equal(out.astype(jnp.float32), ref), "mismatch case 1"

    # Case 2: multiple feature blocks (2 x rb=16) and multiple time blocks
    # (state carry / reset paths), still fully pad-free.
    T2, B2, N2 = 20, 4, 1024
    x2 = 2.0 * jax.random.uniform(k2, (T2, B2, N2), dtype=jnp.float32)
    out2 = jax.block_until_ready(
        lif_forward(x2, tau=tau, v_threshold=v_threshold, time_block=8))
    ref2 = lif_reference(x2, tau=tau, v_threshold=v_threshold)
    assert out2.shape == (T2, B2, N2)
    assert jnp.array_equal(out2.astype(jnp.float32), ref2), "mismatch case 2"

    # Case 3: ragged shapes exercising the lane-padding and time-padding
    # fallback paths (B*N not a multiple of 128, prime T).
    T3, B3, N3 = 13, 2, 200
    x3 = 2.0 * jax.random.uniform(k3, (T3, B3, N3), dtype=jnp.float32)
    out3 = jax.block_until_ready(
        lif_forward(x3, tau=tau, v_threshold=v_threshold, time_block=8))
    ref3 = lif_reference(x3, tau=tau, v_threshold=v_threshold)
    assert out3.shape == (T3, B3, N3)
    assert jnp.array_equal(out3.astype(jnp.float32), ref3), "mismatch case 3"

    print("KERNEL_OK")
</pallas_src>

<mosaic_0001>
module attributes {stable_mosaic.version = 11 : i64} {
  func.func @_lif_kernel(%arg0: i32, %arg1: i32, %arg2: memref<8x1x128xf32, #tpu.memory_space<vmem>>, %arg3: memref<8x1x128xbf16, #tpu.memory_space<vmem>>, %arg4: memref<1x128xf32, #tpu.memory_space<vmem>>, %arg5: memref<1x128xf32, #tpu.memory_space<vmem>>) attributes {dimension_semantics = [#tpu.dimension_semantics<parallel>, #tpu.dimension_semantics<arbitrary>], iteration_bounds = array<i64: 1, 1>, scalar_prefetch = 0 : i64, scratch_operands = 2 : i64, tpu.core_type = #tpu.core_type<tc>, window_params = [{transform_indices = @transform_0, window_bounds = array<i64: 8, 1, 128>}, {transform_indices = @transform_1, window_bounds = array<i64: 8, 1, 128>}]} {
    %c0_i32 = arith.constant 0 : i32
    %0 = arith.cmpi eq, %arg1, %c0_i32 : i32
    %1 = arith.extui %0 : i1 to i32
    %c0_i32_0 = arith.constant 0 : i32
    %2 = arith.cmpi ne, %1, %c0_i32_0 : i32
    scf.if %2 {
      %cst_43 = arith.constant 0.000000e+00 : f32
      %159 = vector.broadcast %cst_43 : f32 to vector<1x128xf32>
      %c0_44 = arith.constant 0 : index
      %c0_45 = arith.constant 0 : index
      %160 = vector.load %arg4[%c0_44, %c0_45] : memref<1x128xf32, #tpu.memory_space<vmem>>, vector<1x128xf32>
      tpu.vector_store %arg4[%c0_44, %c0_45], %159 {strides = array<i32>} : memref<1x128xf32, #tpu.memory_space<vmem>>, vector<1x128xf32>,
      %cst_46 = arith.constant 0.000000e+00 : f32
      %161 = vector.broadcast %cst_46 : f32 to vector<1x128xf32>
      %c0_47 = arith.constant 0 : index
      %c0_48 = arith.constant 0 : index
      %162 = vector.load %arg5[%c0_47, %c0_48] : memref<1x128xf32, #tpu.memory_space<vmem>>, vector<1x128xf32>
      tpu.vector_store %arg5[%c0_47, %c0_48], %161 {strides = array<i32>} : memref<1x128xf32, #tpu.memory_space<vmem>>, vector<1x128xf32>,
    } else {
    }
    %c0 = arith.constant 0 : index
    %c0_1 = arith.constant 0 : index
    %3 = vector.load %arg4[%c0, %c0_1] : memref<1x128xf32, #tpu.memory_space<vmem>>, vector<1x128xf32>
    %c0_2 = arith.constant 0 : index
    %c0_3 = arith.constant 0 : index
    %4 = vector.load %arg5[%c0_2, %c0_3] : memref<1x128xf32, #tpu.memory_space<vmem>>, vector<1x128xf32>
    %cst = arith.constant 1.000000e+00 : f32
    %cst_4 = arith.constant 0.000000e+00 : f32
    %cst_5 = arith.constant 5.000000e-01 : f32
    %c0_i32_6 = arith.constant 0 : i32
    %5 = vector.broadcast %cst : f32 to vector<1x128xf32>
    %6 = arith.subf %3, %5 : vector<1x128xf32>
    %7 = vector.broadcast %cst_4 : f32 to vector<1x128xf32>
    %8 = arith.cmpf ogt, %6, %7 : vector<1x128xf32>
    %9 = arith.extui %8 : vector<1x128xi1> to vector<1x128xi32>
    %10 = arith.sitofp %9 : vector<1x128xi32> to vector<1x128xf32>
    %11 = arith.truncf %10 : vector<1x128xf32> to vector<1x128xbf16>
    %12 = arith.index_cast %c0_i32_6 : i32 to index
    %c0_7 = arith.constant 0 : index
    %c0_8 = arith.constant 0 : index
    %13 = vector.load %arg3[%12, %c0_7, %c0_8] : memref<8x1x128xbf16, #tpu.memory_space<vmem>>, vector<1x1x128xbf16>
    %14 = vector.shape_cast %13 : vector<1x1x128xbf16> to vector<1x128xbf16>
    %15 = vector.shape_cast %11 : vector<1x128xbf16> to vector<1x1x128xbf16>
    tpu.vector_store %arg3[%12, %c0_7, %c0_8], %15 {strides = array<i32>} : memref<8x1x128xbf16, #tpu.memory_space<vmem>>, vector<1x1x128xbf16>,
    %16 = vector.broadcast %cst_5 : f32 to vector<1x128xf32>
    %17 = arith.mulf %16, %3 : vector<1x128xf32>
    %18 = arith.addf %17, %4 : vector<1x128xf32>
    %19 = vector.broadcast %cst_4 : f32 to vector<1x128xf32>
    %20 = arith.select %8, %19, %18 : vector<1x128xi1>, vector<1x128xf32>
    %21 = arith.index_cast %c0_i32_6 : i32 to index
    %c0_9 = arith.constant 0 : index
    %c0_10 = arith.constant 0 : index
    %22 = vector.load %arg2[%21, %c0_9, %c0_10] : memref<8x1x128xf32, #tpu.memory_space<vmem>>, vector<1x1x128xf32>
    %23 = vector.shape_cast %22 : vector<1x1x128xf32> to vector<1x128xf32>
    %c1_i32 = arith.constant 1 : i32
    %24 = vector.broadcast %cst : f32 to vector<1x128xf32>
    %25 = arith.subf %20, %24 : vector<1x128xf32>
    %26 = vector.broadcast %cst_4 : f32 to vector<1x128xf32>
    %27 = arith.cmpf ogt, %25, %26 : vector<1x128xf32>
    %28 = arith.extui %27 : vector<1x128xi1> to vector<1x128xi32>
    %29 = arith.sitofp %28 : vector<1x128xi32> to vector<1x128xf32>
    %30 = arith.truncf %29 : vector<1x128xf32> to vector<1x128xbf16>
    %31 = arith.index_cast %c1_i32 : i32 to index
    %c0_11 = arith.constant 0 : index
    %c0_12 = arith.constant 0 : index
    %32 = vector.load %arg3[%31, %c0_11, %c0_12] : memref<8x1x128xbf16, #tpu.memory_space<vmem>>, vector<1x1x128xbf16>
    %33 = vector.shape_cast %32 : vector<1x1x128xbf16> to vector<1x128xbf16>
    %34 = vector.shape_cast %30 : vector<1x128xbf16> to vector<1x1x128xbf16>
    tpu.vector_store %arg3[%31, %c0_11, %c0_12], %34 {strides = array<i32>} : memref<8x1x128xbf16, #tpu.memory_space<vmem>>, vector<1x1x128xbf16>,
    %35 = vector.broadcast %cst_5 : f32 to vector<1x128xf32>
    %36 = arith.mulf %35, %20 : vector<1x128xf32>
    %37 = arith.addf %36, %23 : vector<1x128xf32>
    %38 = vector.broadcast %cst_4 : f32 to vector<1x128xf32>
    %39 = arith.select %27, %38, %37 : vector<1x128xi1>, vector<1x128xf32>
    %40 = arith.index_cast %c1_i32 : i32 to index
    %c0_13 = arith.constant 0 : index
    %c0_14 = arith.constant 0 : index
    %41 = vector.load %arg2[%40, %c0_13, %c0_14] : memref<8x1x128xf32, #tpu.memory_space<vmem>>, vector<1x1x128xf32>
    %42 = vector.shape_cast %41 : vector<1x1x128xf32> to vector<1x128xf32>
    %c2_i32 = arith.constant 2 : i32
    %43 = vector.broadcast %cst : f32 to vector<1x128xf32>
    %44 = arith.subf %39, %43 : vector<1x128xf32>
    %45 = vector.broadcast %cst_4 : f32 to vector<1x128xf32>
    %46 = arith.cmpf ogt, %44, %45 : vector<1x128xf32>
    %47 = arith.extui %46 : vector<1x128xi1> to vector<1x128xi32>
    %48 = arith.sitofp %47 : vector<1x128xi32> to vector<1x128xf32>
    %49 = arith.truncf %48 : vector<1x128xf32> to vector<1x128xbf16>
    %50 = arith.index_cast %c2_i32 : i32 to index
    %c0_15 = arith.constant 0 : index
    %c0_16 = arith.constant 0 : index
    %51 = vector.load %arg3[%50, %c0_15, %c0_16] : memref<8x1x128xbf16, #tpu.memory_space<vmem>>, vector<1x1x128xbf16>
    %52 = vector.shape_cast %51 : vector<1x1x128xbf16> to vector<1x128xbf16>
    %53 = vector.shape_cast %49 : vector<1x128xbf16> to vector<1x1x128xbf16>
    tpu.vector_store %arg3[%50, %c0_15, %c0_16], %53 {strides = array<i32>} : memref<8x1x128xbf16, #tpu.memory_space<vmem>>, vector<1x1x128xbf16>,
    %54 = vector.broadcast %cst_5 : f32 to vector<1x128xf32>
    %55 = arith.mulf %54, %39 : vector<1x128xf32>
    %56 = arith.addf %55, %42 : vector<1x128xf32>
    %57 = vector.broadcast %cst_4 : f32 to vector<1x128xf32>
    %58 = arith.select %46, %57, %56 : vector<1x128xi1>, vector<1x128xf32>
    %59 = arith.index_cast %c2_i32 : i32 to index
    %c0_17 = arith.constant 0 : index
    %c0_18 = arith.constant 0 : index
    %60 = vector.load %arg2[%59, %c0_17, %c0_18] : memref<8x1x128xf32, #tpu.memory_space<vmem>>, vector<1x1x128xf32>
    %61 = vector.shape_cast %60 : vector<1x1x128xf32> to vector<1x128xf32>
    %c3_i32 = arith.constant 3 : i32
    %62 = vector.broadcast %cst : f32 to vector<1x128xf32>
    %63 = arith.subf %58, %62 : vector<1x128xf32>
    %64 = vector.broadcast %cst_4 : f32 to vector<1x128xf32>
    %65 = arith.cmpf ogt, %63, %64 : vector<1x128xf32>
    %66 = arith.extui %65 : vector<1x128xi1> to vector<1x128xi32>
    %67 = arith.sitofp %66 : vector<1x128xi32> to vector<1x128xf32>
    %68 = arith.truncf %67 : vector<1x128xf32> to vector<1x128xbf16>
    %69 = arith.index_cast %c3_i32 : i32 to index
    %c0_19 = arith.constant 0 : index
    %c0_20 = arith.constant 0 : index
    %70 = vector.load %arg3[%69, %c0_19, %c0_20] : memref<8x1x128xbf16, #tpu.memory_space<vmem>>, vector<1x1x128xbf16>
    %71 = vector.shape_cast %70 : vector<1x1x128xbf16> to vector<1x128xbf16>
    %72 = vector.shape_cast %68 : vector<1x128xbf16> to vector<1x1x128xbf16>
    tpu.vector_store %arg3[%69, %c0_19, %c0_20], %72 {strides = array<i32>} : memref<8x1x128xbf16, #tpu.memory_space<vmem>>, vector<1x1x128xbf16>,
    %73 = vector.broadcast %cst_5 : f32 to vector<1x128xf32>
    %74 = arith.mulf %73, %58 : vector<1x128xf32>
    %75 = arith.addf %74, %61 : vector<1x128xf32>
    %76 = vector.broadcast %cst_4 : f32 to vector<1x128xf32>
    %77 = arith.select %65, %76, %75 : vector<1x128xi1>, vector<1x128xf32>
    %78 = arith.index_cast %c3_i32 : i32 to index
    %c0_21 = arith.constant 0 : index
    %c0_22 = arith.constant 0 : index
    %79 = vector.load %arg2[%78, %c0_21, %c0_22] : memref<8x1x128xf32, #tpu.memory_space<vmem>>, vector<1x1x128xf32>
    %80 = vector.shape_cast %79 : vector<1x1x128xf32> to vector<1x128xf32>
    %c4_i32 = arith.constant 4 : i32
    %81 = vector.broadcast %cst : f32 to vector<1x128xf32>
    %82 = arith.subf %77, %81 : vector<1x128xf32>
    %83 = vector.broadcast %cst_4 : f32 to vector<1x128xf32>
    %84 = arith.cmpf ogt, %82, %83 : vector<1x128xf32>
    %85 = arith.extui %84 : vector<1x128xi1> to vector<1x128xi32>
    %86 = arith.sitofp %85 : vector<1x128xi32> to vector<1x128xf32>
    %87 = arith.truncf %86 : vector<1x128xf32> to vector<1x128xbf16>
    %88 = arith.index_cast %c4_i32 : i32 to index
    %c0_23 = arith.constant 0 : index
    %c0_24 = arith.constant 0 : index
    %89 = vector.load %arg3[%88, %c0_23, %c0_24] : memref<8x1x128xbf16, #tpu.memory_space<vmem>>, vector<1x1x128xbf16>
    %90 = vector.shape_cast %89 : vector<1x1x128xbf16> to vector<1x128xbf16>
    %91 = vector.shape_cast %87 : vector<1x128xbf16> to vector<1x1x128xbf16>
    tpu.vector_store %arg3[%88, %c0_23, %c0_24], %91 {strides = array<i32>} : memref<8x1x128xbf16, #tpu.memory_space<vmem>>, vector<1x1x128xbf16>,
    %92 = vector.broadcast %cst_5 : f32 to vector<1x128xf32>
    %93 = arith.mulf %92, %77 : vector<1x128xf32>
    %94 = arith.addf %93, %80 : vector<1x128xf32>
    %95 = vector.broadcast %cst_4 : f32 to vector<1x128xf32>
    %96 = arith.select %84, %95, %94 : vector<1x128xi1>, vector<1x128xf32>
    %97 = arith.index_cast %c4_i32 : i32 to index
    %c0_25 = arith.constant 0 : index
    %c0_26 = arith.constant 0 : index
    %98 = vector.load %arg2[%97, %c0_25, %c0_26] : memref<8x1x128xf32, #tpu.memory_space<vmem>>, vector<1x1x128xf32>
    %99 = vector.shape_cast %98 : vector<1x1x128xf32> to vector<1x128xf32>
    %c5_i32 = arith.constant 5 : i32
    %100 = vector.broadcast %cst : f32 to vector<1x128xf32>
    %101 = arith.subf %96, %100 : vector<1x128xf32>
    %102 = vector.broadcast %cst_4 : f32 to vector<1x128xf32>
    %103 = arith.cmpf ogt, %101, %102 : vector<1x128xf32>
    %104 = arith.extui %103 : vector<1x128xi1> to vector<1x128xi32>
    %105 = arith.sitofp %104 : vector<1x128xi32> to vector<1x128xf32>
    %106 = arith.truncf %105 : vector<1x128xf32> to vector<1x128xbf16>
    %107 = arith.index_cast %c5_i32 : i32 to index
    %c0_27 = arith.constant 0 : index
    %c0_28 = arith.constant 0 : index
    %108 = vector.load %arg3[%107, %c0_27, %c0_28] : memref<8x1x128xbf16, #tpu.memory_space<vmem>>, vector<1x1x128xbf16>
    %109 = vector.shape_cast %108 : vector<1x1x128xbf16> to vector<1x128xbf16>
    %110 = vector.shape_cast %106 : vector<1x128xbf16> to vector<1x1x128xbf16>
    tpu.vector_store %arg3[%107, %c0_27, %c0_28], %110 {strides = array<i32>} : memref<8x1x128xbf16, #tpu.memory_space<vmem>>, vector<1x1x128xbf16>,
    %111 = vector.broadcast %cst_5 : f32 to vector<1x128xf32>
    %112 = arith.mulf %111, %96 : vector<1x128xf32>
    %113 = arith.addf %112, %99 : vector<1x128xf32>
    %114 = vector.broadcast %cst_4 : f32 to vector<1x128xf32>
    %115 = arith.select %103, %114, %113 : vector<1x128xi1>, vector<1x128xf32>
    %116 = arith.index_cast %c5_i32 : i32 to index
    %c0_29 = arith.constant 0 : index
    %c0_30 = arith.constant 0 : index
    %117 = vector.load %arg2[%116, %c0_29, %c0_30] : memref<8x1x128xf32, #tpu.memory_space<vmem>>, vector<1x1x128xf32>
    %118 = vector.shape_cast %117 : vector<1x1x128xf32> to vector<1x128xf32>
    %c6_i32 = arith.constant 6 : i32
    %119 = vector.broadcast %cst : f32 to vector<1x128xf32>
    %120 = arith.subf %115, %119 : vector<1x128xf32>
    %121 = vector.broadcast %cst_4 : f32 to vector<1x128xf32>
    %122 = arith.cmpf ogt, %120, %121 : vector<1x128xf32>
    %123 = arith.extui %122 : vector<1x128xi1> to vector<1x128xi32>
    %124 = arith.sitofp %123 : vector<1x128xi32> to vector<1x128xf32>
    %125 = arith.truncf %124 : vector<1x128xf32> to vector<1x128xbf16>
    %126 = arith.index_cast %c6_i32 : i32 to index
    %c0_31 = arith.constant 0 : index
    %c0_32 = arith.constant 0 : index
    %127 = vector.load %arg3[%126, %c0_31, %c0_32] : memref<8x1x128xbf16, #tpu.memory_space<vmem>>, vector<1x1x128xbf16>
    %128 = vector.shape_cast %127 : vector<1x1x128xbf16> to vector<1x128xbf16>
    %129 = vector.shape_cast %125 : vector<1x128xbf16> to vector<1x1x128xbf16>
    tpu.vector_store %arg3[%126, %c0_31, %c0_32], %129 {strides = array<i32>} : memref<8x1x128xbf16, #tpu.memory_space<vmem>>, vector<1x1x128xbf16>,
    %130 = vector.broadcast %cst_5 : f32 to vector<1x128xf32>
    %131 = arith.mulf %130, %115 : vector<1x128xf32>
    %132 = arith.addf %131, %118 : vector<1x128xf32>
    %133 = vector.broadcast %cst_4 : f32 to vector<1x128xf32>
    %134 = arith.select %122, %133, %132 : vector<1x128xi1>, vector<1x128xf32>
    %135 = arith.index_cast %c6_i32 : i32 to index
    %c0_33 = arith.constant 0 : index
    %c0_34 = arith.constant 0 : index
    %136 = vector.load %arg2[%135, %c0_33, %c0_34] : memref<8x1x128xf32, #tpu.memory_space<vmem>>, vector<1x1x128xf32>
    %137 = vector.shape_cast %136 : vector<1x1x128xf32> to vector<1x128xf32>
    %c7_i32 = arith.constant 7 : i32
    %138 = vector.broadcast %cst : f32 to vector<1x128xf32>
    %139 = arith.subf %134, %138 : vector<1x128xf32>
    %140 = vector.broadcast %cst_4 : f32 to vector<1x128xf32>
    %141 = arith.cmpf ogt, %139, %140 : vector<1x128xf32>
    %142 = arith.extui %141 : vector<1x128xi1> to vector<1x128xi32>
    %143 = arith.sitofp %142 : vector<1x128xi32> to vector<1x128xf32>
    %144 = arith.truncf %143 : vector<1x128xf32> to vector<1x128xbf16>
    %145 = arith.index_cast %c7_i32 : i32 to index
    %c0_35 = arith.constant 0 : index
    %c0_36 = arith.constant 0 : index
    %146 = vector.load %arg3[%145, %c0_35, %c0_36] : memref<8x1x128xbf16, #tpu.memory_space<vmem>>, vector<1x1x128xbf16>
    %147 = vector.shape_cast %146 : vector<1x1x128xbf16> to vector<1x128xbf16>
    %148 = vector.shape_cast %144 : vector<1x128xbf16> to vector<1x1x128xbf16>
    tpu.vector_store %arg3[%145, %c0_35, %c0_36], %148 {strides = array<i32>} : memref<8x1x128xbf16, #tpu.memory_space<vmem>>, vector<1x1x128xbf16>,
    %149 = vector.broadcast %cst_5 : f32 to vector<1x128xf32>
    %150 = arith.mulf %149, %134 : vector<1x128xf32>
    %151 = arith.addf %150, %137 : vector<1x128xf32>
    %152 = vector.broadcast %cst_4 : f32 to vector<1x128xf32>
    %153 = arith.select %141, %152, %151 : vector<1x128xi1>, vector<1x128xf32>
    %154 = arith.index_cast %c7_i32 : i32 to index
    %c0_37 = arith.constant 0 : index
    %c0_38 = arith.constant 0 : index
    %155 = vector.load %arg2[%154, %c0_37, %c0_38] : memref<8x1x128xf32, #tpu.memory_space<vmem>>, vector<1x1x128xf32>
    %156 = vector.shape_cast %155 : vector<1x1x128xf32> to vector<1x128xf32>
    %c8_i32 = arith.constant 8 : i32
    %c0_39 = arith.constant 0 : index
    %c0_40 = arith.constant 0 : index
    %157 = vector.load %arg4[%c0_39, %c0_40] : memref<1x128xf32, #tpu.memory_space<vmem>>, vector<1x128xf32>
    tpu.vector_store %arg4[%c0_39, %c0_40], %153 {strides = array<i32>} : memref<1x128xf32, #tpu.memory_space<vmem>>, vector<1x128xf32>,
    %c0_41 = arith.constant 0 : index
    %c0_42 = arith.constant 0 : index
    %158 = vector.load %arg5[%c0_41, %c0_42] : memref<1x128xf32, #tpu.memory_space<vmem>>, vector<1x128xf32>
    tpu.vector_store %arg5[%c0_41, %c0_42], %156 {strides = array<i32>} : memref<1x128xf32, #tpu.memory_space<vmem>>, vector<1x128xf32>,
    return
  }
  func.func @transform_0(%arg0: i32, %arg1: i32) -> (i32, i32, i32) {
    %c0_i32 = arith.constant 0 : i32
    %c0_i32_0 = arith.constant 0 : i32
    return %arg1, %arg0, %c0_i32 : i32, i32, i32
  }
  func.func @transform_1(%arg0: i32, %arg1: i32) -> (i32, i32, i32) {
    %c0_i32 = arith.constant 0 : i32
    %c0_i32_0 = arith.constant 0 : i32
    return %arg1, %arg0, %c0_i32 : i32, i32, i32
  }
}

</mosaic_0001>

<llo_original>
// kernel: tpu_custom_call.1
$region0: #{tpu_custom_call.1}
  #allocation0 [shape = 'u32[]', space=smem, size = 0x4, offset = 0x4, fixed_abs, tag = 'smem constant byte address 0x4 - core index']
  #allocation1 [shape = 'u32[144,128]{1,0:T(1,128)}', space=vmem, size = 0x12000, scoped, tag = 'internal scratch']
  #allocation2 [shape = 'f32[1,128]{1,0:T(1,128)}', space=vmem, size = 0x200, scoped, tag = 'scratch operand']
  #allocation3 [shape = 'f32[1,128]{1,0:T(1,128)}', space=vmem, size = 0x200, scoped, tag = 'scratch operand']
  %s0 = inlined_call_operand.hbm [shape: f32[8,1,128], index: 0, kind: input, shape index: {}]
  %s1 = inlined_call_operand.vmem [shape: bf16[8,1,128], index: 1, kind: output, shape index: {}]
  %s2 = sld [smem:[#allocation0]]
  $region22: #{tpu_custom_call.1} parent=0
    _
  %s4 = ssub.s32 1, %s2
  %s5 = scalar_select 0, %s4, %s2
  $region1: #{tpu_custom_call.1} parent=0
    #allocation4 [shape = 'u8[4096]{0}', space=vmem, size = 0x1000, scoped, tag = 'input window, operand 0, single buffered']
    #allocation5 [shape = 's32[1]{0}', space=sflag, size = 0x4, scoped, tag = 'scoped memory for tpu_custom_call.1']
    %6 = vsyncpa [#allocation5], 0
    // Predicated region
    $region2: #{tpu_custom_call.1} parent=1 // pred_check
      _
    $region3: #{tpu_custom_call.1} parent=1 // pred_check_branch
      %8 = sbr.rel (0) target = $region5
    $region4: #{tpu_custom_call.1} parent=1 // pred_region
      %s10 = ssub.s32 128, 128
      %11 = vsyncadd [#allocation5], %s10
      %s12 = sshll.u32 [#allocation4], 4
      %s13 = int_to_ptr.vmem [resolvable:$true] %s12
      %18 = dma.hbm_to_vmem [thread:$0]  %s0, 128, %s13, [#allocation5], 16, 16, 1
    $region5: #{tpu_custom_call.1} parent=1 // pred_fallthru
      _
    // Predicated region
    $region6: #{tpu_custom_call.1} parent=1 // pred_check
      _
    $region7: #{tpu_custom_call.1} parent=1 // pred_check_branch
      %20 = sbr.rel (0) target = $region9
    $region8: #{tpu_custom_call.1} parent=1 // pred_region
      %21 = dma.done [#allocation5], 128
    $region9: #{tpu_custom_call.1} parent=1 // pred_fallthru
      _
    %p22 = scmp.eq.s32.totalorder 0, 0
    // Predicated region
    $region10: #{tpu_custom_call.1} parent=1 // pred_check
      %p23 = pneg %p22
    $region11: #{tpu_custom_call.1} parent=1 // pred_check_branch
      %25 = sbr.rel (%p23) target = $region13
    $region12: #{tpu_custom_call.1} parent=1 // pred_region
      %26 = vst [vmem:[#allocation2] sm:$0x1] 0.0
      %27 = vst [vmem:[#allocation3] sm:$0x1] 0.0
    $region13: #{tpu_custom_call.1} parent=1 // pred_fallthru
      _
    %v28 = vld [vmem:[#allocation2] sm:$0x1]
    %v29 = vld [vmem:[#allocation3] sm:$0x1]
    %v30 = vsub.f32 %v28, 1.0
    %vm31 = vcmp.gt.f32.partialorder %v30, 0.0
    %v32 = vsel %vm31, 1, 0
    %v33 = vcvt.s32.f32 %v32
    %v34 = vpack.c.bf16 %v33, %v33
    %vm35 = vcmask 1040384
    %vm36 = vsmask.f32 256
    %vm37 = vmand %vm35, %vm36
    %v38 = vld [vmem:[%s1] sm:$0x1]
    %v39 = vsel %vm37, %v34, %v38
    %40 = vst [vmem:[%s1] sm:$0x1] %v39
    %v41 = vmul.f32 %v28, 0.5
    %v42 = vadd.f32 %v41, %v29
    %v43 = vsel %vm31, 0.0, %v42
    %v44 = vld [vmem:[#allocation4] sm:$0x1]
    %v45 = vsub.f32 %v43, 1.0
    %vm46 = vcmp.gt.f32.partialorder %v45, 0.0
    %v47 = vsel %vm46, 1, 0
    %v48 = vcvt.s32.f32 %v47
    %v49 = vpack.c.bf16 %v48, %v48
    %s50 = scalar_lea.vmem %s1, 1
    %v51 = vld [vmem:[%s50] sm:$0x1]
    %v52 = vsel %vm37, %v49, %v51
    %53 = vst [vmem:[%s50] sm:$0x1] %v52
    %v54 = vmul.f32 %v43, 0.5
    %v55 = vadd.f32 %v54, %v44
    %v56 = vsel %vm46, 0.0, %v55
    %s57 = scalar_lea.vmem [#allocation4], 1
    %v58 = vld [vmem:[%s57] sm:$0x1]
    %v59 = vsub.f32 %v56, 1.0
    %vm60 = vcmp.gt.f32.partialorder %v59, 0.0
    %v61 = vsel %vm60, 1, 0
    %v62 = vcvt.s32.f32 %v61
    %v63 = vpack.c.bf16 %v62, %v62
    %s64 = scalar_lea.vmem %s1, 2
    %v65 = vld [vmem:[%s64] sm:$0x1]
    %v66 = vsel %vm37, %v63, %v65
    %67 = vst [vmem:[%s64] sm:$0x1] %v66
    %v68 = vmul.f32 %v56, 0.5
    %v69 = vadd.f32 %v68, %v58
    %v70 = vsel %vm60, 0.0, %v69
    %s71 = scalar_lea.vmem [#allocation4], 2
    %v72 = vld [vmem:[%s71] sm:$0x1]
    %v73 = vsub.f32 %v70, 1.0
    %vm74 = vcmp.gt.f32.partialorder %v73, 0.0
    %v75 = vsel %vm74, 1, 0
    %v76 = vcvt.s32.f32 %v75
    %v77 = vpack.c.bf16 %v76, %v76
    %s78 = scalar_lea.vmem %s1, 3
    %v79 = vld [vmem:[%s78] sm:$0x1]
    %v80 = vsel %vm37, %v77, %v79
    %81 = vst [vmem:[%s78] sm:$0x1] %v80
    %v82 = vmul.f32 %v70, 0.5
    %v83 = vadd.f32 %v82, %v72
    %v84 = vsel %vm74, 0.0, %v83
    %s85 = scalar_lea.vmem [#allocation4], 3
    %v86 = vld [vmem:[%s85] sm:$0x1]
    %v87 = vsub.f32 %v84, 1.0
    %vm88 = vcmp.gt.f32.partialorder %v87, 0.0
    %v89 = vsel %vm88, 1, 0
    %v90 = vcvt.s32.f32 %v89
    %v91 = vpack.c.bf16 %v90, %v90
    %s92 = scalar_lea.vmem %s1, 4
    %v93 = vld [vmem:[%s92] sm:$0x1]
    %v94 = vsel %vm37, %v91, %v93
    %95 = vst [vmem:[%s92] sm:$0x1] %v94
    %v96 = vmul.f32 %v84, 0.5
    %v97 = vadd.f32 %v96, %v86
    %v98 = vsel %vm88, 0.0, %v97
    %s99 = scalar_lea.vmem [#allocation4], 4
    %v100 = vld [vmem:[%s99] sm:$0x1]
    %v101 = vsub.f32 %v98, 1.0
    %vm102 = vcmp.gt.f32.partialorder %v101, 0.0
    %v103 = vsel %vm102, 1, 0
    %v104 = vcvt.s32.f32 %v103
    %v105 = vpack.c.bf16 %v104, %v104
    %s106 = scalar_lea.vmem %s1, 5
    %v107 = vld [vmem:[%s106] sm:$0x1]
    %v108 = vsel %vm37, %v105, %v107
    %109 = vst [vmem:[%s106] sm:$0x1] %v108
    %v110 = vmul.f32 %v98, 0.5
    %v111 = vadd.f32 %v110, %v100
    %v112 = vsel %vm102, 0.0, %v111
    %s113 = scalar_lea.vmem [#allocation4], 5
    %v114 = vld [vmem:[%s113] sm:$0x1]
    %v115 = vsub.f32 %v112, 1.0
    %vm116 = vcmp.gt.f32.partialorder %v115, 0.0
    %v117 = vsel %vm116, 1, 0
    %v118 = vcvt.s32.f32 %v117
    %v119 = vpack.c.bf16 %v118, %v118
    %s120 = scalar_lea.vmem %s1, 6
    %v121 = vld [vmem:[%s120] sm:$0x1]
    %v122 = vsel %vm37, %v119, %v121
    %123 = vst [vmem:[%s120] sm:$0x1] %v122
    %v124 = vmul.f32 %v112, 0.5
    %v125 = vadd.f32 %v124, %v114
    %v126 = vsel %vm116, 0.0, %v125
    %s127 = scalar_lea.vmem [#allocation4], 6
    %v128 = vld [vmem:[%s127] sm:$0x1]
    %v129 = vsub.f32 %v126, 1.0
    %vm130 = vcmp.gt.f32.partialorder %v129, 0.0
    %v131 = vsel %vm130, 1, 0
    %v132 = vcvt.s32.f32 %v131
    %v133 = vpack.c.bf16 %v132, %v132
    %s134 = scalar_lea.vmem %s1, 7
    %v135 = vld [vmem:[%s134] sm:$0x1]
    %v136 = vsel %vm37, %v133, %v135
    %137 = vst [vmem:[%s134] sm:$0x1] %v136
    %v138 = vmul.f32 %v126, 0.5
    %v139 = vadd.f32 %v138, %v128
    %v140 = vsel %vm130, 0.0, %v139
    %s141 = scalar_lea.vmem [#allocation4], 7
    %v142 = vld [vmem:[%s141] sm:$0x1]
    %143 = vst [vmem:[#allocation2] sm:$0x1] %v140
    %144 = vst [vmem:[#allocation3] sm:$0x1] %v142
    // Predicated region
    $region14: #{tpu_custom_call.1} parent=1 // pred_check
      _
    $region15: #{tpu_custom_call.1} parent=1 // pred_check_branch
      %146 = sbr.rel (0) target = $region17
    $region16: #{tpu_custom_call.1} parent=1 // pred_region
      _
    $region17: #{tpu_custom_call.1} parent=1 // pred_fallthru
      _
    // Predicated region
    $region18: #{tpu_custom_call.1} parent=1 // pred_check
      _
    $region19: #{tpu_custom_call.1} parent=1 // pred_check_branch
      %148 = sbr.rel (0) target = $region21
    $region20: #{tpu_custom_call.1} parent=1 // pred_region
      _
    $region21: #{tpu_custom_call.1} parent=1 // pred_fallthru
      _
    %149 = vsyncpa [#allocation5], 1

</llo_original>
